<compile_context>
chip_gen: v6e
topology: v6e:2x2x1
jax: 0.10.0
libtpu: 0.0.40
codegen_flags: <defaults>
</compile_context>

<pallas_src>
import jax
import jax.numpy as jnp
from jax import lax
from jax.experimental import pallas as pl
from jax.experimental.pallas import tpu as pltpu


# --------------------------------------------------------------------------- #
# Pallas kernel: 3x3 conv (stride 1, pad 1, BN-folded weights) + bias + ReLU
# --------------------------------------------------------------------------- #
def _conv3x3_bn_relu_kernel(x_ref, w_ref, bias_ref, o_ref):
    # x_ref:    (1, Hp, Wp, Cin)   bf16  full spatially padded image (resident)
    # w_ref:    (9*Cin, Cout)      bf16  BN-scale-folded weights, (kw, kh, cin)-major
    # bias_ref: (1, Cout)          f32   folded BN bias
    # o_ref:    (1, Cout, TH*W)    bf16  one output row strip, channel-major (NCHW)
    Cout = o_ref.shape[1]
    Wp = x_ref.shape[2]
    Cin = x_ref.shape[3]
    W = Wp - 2
    TH = o_ref.shape[2] // W

    # Output rows [h*TH, h*TH+TH) need padded input rows [h*TH, h*TH+TH+2).
    row0 = pl.program_id(1) * TH
    if TH % 8 == 0:
        row0 = pl.multiple_of(row0, 8)
    x = x_ref[0, pl.ds(row0, TH + 2), :, :]            # (TH+2, W+2, Cin) bf16

    # im2col: one (TH*W, 9*Cin) patch matrix -> a single big-K MXU matmul.
    # Only the kw != 0 column shifts cost a copy; the kh slices are free
    # leading-dim views.
    taps = []
    for kw in range(3):
        xs = x[:, kw:kw + W, :]                        # (TH+2, W, Cin)
        for kh in range(3):
            taps.append(xs[kh:kh + TH, :, :].reshape(TH * W, Cin))
    patches = jnp.concatenate(taps, axis=1)            # (TH*W, 9*Cin) bf16

    acc = jnp.dot(patches, w_ref[...],
                  preferred_element_type=jnp.float32)  # (TH*W, Cout) f32
    y = jnp.maximum(acc + bias_ref[...], 0.0)          # bias-add + ReLU in f32
    # Transpose on the XLU (it has slack in this mem-bound kernel) so the store
    # is channel-major (NCHW) and lane-dense, then cast once to bf16.
    o_ref[0] = y.T.astype(o_ref.dtype)                 # (Cout, TH*W) bf16


# --------------------------------------------------------------------------- #
# Tiling / VMEM policy
# --------------------------------------------------------------------------- #
def _device_vmem_budget():
    """(vmem_limit_bytes, row_tile_cap) per TPU generation; conservative fallback."""
    try:
        cap = pltpu.get_tpu_info().vmem_capacity_bytes
    except Exception:
        cap = 64 * 1024 * 1024                 # assume v7x-class (smallest VMEM)
    if cap >= 100 * 1024 * 1024:               # v5e / v6e class: 128 MiB VMEM
        return 96 * 1024 * 1024, 128
    return 48 * 1024 * 1024, 64                # v7x class: 64 MiB VMEM


def _pick_row_tile(ho, wo, cin, cout, row_cap, vmem_budget):
    """Largest row strip TH that (a) divides Ho, (b) keeps the flattened output
    block lane-aligned (TH*Wo % 128 == 0, or TH == Ho), and (c) fits a rough,
    conservative VMEM estimate. Falls back to the whole image as one strip."""
    def est(th):
        resident = 2 * (ho + 2) * (wo + 2) * cin * 2      # dbl-buffered bf16 input image
        out_buf = 2 * th * wo * cout * 2                  # dbl-buffered bf16 output strip
        temps = th * wo * (9 * cin * 2 + 2 * cout * 4)    # im2col bf16 + f32 acc/transpose
        return resident + out_buf + temps

    start = min(row_cap, ho)
    start -= start % 8
    for th in range(start, 7, -8):
        if ho % th == 0 and (th == ho or (th * wo) % 128 == 0) and est(th) <= vmem_budget:
            return th
    return ho


def conv3x3_bn_relu_pallas(x_nhwc, w_taps, bn_bias):
    """x_nhwc: (B, Ho, Wo, Cin) bf16 (unpadded); w_taps: (9*Cin, Cout) bf16.
    Returns (B, Cout, Ho*Wo) bf16 — channel-major with flattened spatial axis;
    reshaping to NCHW in the caller is free (identical memory layout)."""
    B, Ho, Wo, Cin = x_nhwc.shape
    Cout = w_taps.shape[-1]

    vmem_limit, row_cap = _device_vmem_budget()
    th = _pick_row_tile(Ho, Wo, Cin, Cout, row_cap, vmem_limit * 3 // 4)
    n_strips = Ho // th
    # Note (v7x): with both grid axes "parallel", megacore splits B * n_strips;
    # batch >= 2 keeps both TensorCores busy even when n_strips is odd.

    # padding = 1 for the 3x3 conv (edge handling kept out of the hot loop).
    x_pad = jnp.pad(x_nhwc, ((0, 0), (1, 1), (1, 1), (0, 0)))
    Hp, Wp = Ho + 2, Wo + 2

    return pl.pallas_call(
        _conv3x3_bn_relu_kernel,
        out_shape=jax.ShapeDtypeStruct((B, Cout, Ho * Wo), jnp.bfloat16),
        grid_spec=pltpu.PrefetchScalarGridSpec(
            num_scalar_prefetch=0,
            grid=(B, n_strips),
            in_specs=[
                # Full padded image per batch element; block index is constant
                # along the strip axis so the tile stays resident in VMEM.
                pl.BlockSpec((1, Hp, Wp, Cin), lambda b, h: (b, 0, 0, 0)),
                # Grid-invariant operands: single-buffered.
                pl.BlockSpec((9 * Cin, Cout), lambda b, h: (0, 0),
                             pipeline_mode=pl.Buffered(1)),
                pl.BlockSpec((1, Cout), lambda b, h: (0, 0),
                             pipeline_mode=pl.Buffered(1)),
            ],
            out_specs=pl.BlockSpec((1, Cout, th * Wo), lambda b, h: (b, 0, h)),
        ),
        compiler_params=pltpu.CompilerParams(
            dimension_semantics=("parallel", "parallel"),
            vmem_limit_bytes=vmem_limit),
    )(x_pad, w_taps, bn_bias)


# --------------------------------------------------------------------------- #
# Wrapper glue (layout / parameter folding)
# --------------------------------------------------------------------------- #
def focus_space_to_depth_nhwc(x_nchw):
    """Space-to-depth (== the fixed-weight stride-2 conv of Focus._make_layer)
    fused with the NCHW->NHWC layout change in one reshape/transpose.
    Channel order: [tl(C), bl(C), tr(C), br(C)] to match the PyTorch weights."""
    B, C, H, W = x_nchw.shape
    x6 = x_nchw.reshape(B, C, H // 2, 2, W // 2, 2)
    # -> (B, Ho, Wo, wpar, hpar, C); flattening (wpar, hpar, C) gives tl,bl,tr,br.
    return x6.transpose(0, 2, 4, 5, 3, 1).reshape(B, H // 2, W // 2, 4 * C)


def focus_space_to_depth(x_nchw):
    """NCHW space-to-depth (used only by the pure-JAX reference)."""
    tl = x_nchw[:, :, 0::2, 0::2]
    bl = x_nchw[:, :, 1::2, 0::2]
    tr = x_nchw[:, :, 0::2, 1::2]
    br = x_nchw[:, :, 1::2, 1::2]
    return jnp.concatenate([tl, bl, tr, br], axis=1)


def make_focus_params(in_channels, out_channels, key):
    """Deterministic synthetic parameters (no checkpoint load)."""
    c4 = in_channels * 4
    kw, kg, kb, km, kv = jax.random.split(key, 5)
    conv_w = jax.random.normal(kw, (out_channels, c4, 3, 3), jnp.float32) * 0.1
    gamma = 1.0 + 0.1 * jax.random.normal(kg, (out_channels,), jnp.float32)
    beta = 0.1 * jax.random.normal(kb, (out_channels,), jnp.float32)
    run_mean = 0.1 * jax.random.normal(km, (out_channels,), jnp.float32)
    run_var = 1.0 + 0.1 * jax.random.uniform(kv, (out_channels,), jnp.float32)
    return conv_w, gamma, beta, run_mean, run_var


def focus_forward(x_nchw, conv_w, gamma, beta, run_mean, run_var, eps=1e-3):
    """Full Focus forward (eval-mode BN). Input NCHW f32.
    NOTE: the output is NCHW **bf16** (emitted directly by the kernel to halve
    HBM writeback and skip the old f32 transpose pass); downstream consumers
    therefore see bf16."""
    Cout, Cin = conv_w.shape[0], conv_w.shape[1]
    B = x_nchw.shape[0]
    Ho, Wo = x_nchw.shape[2] // 2, x_nchw.shape[3] // 2

    # Fold eval-mode BatchNorm: scale goes into the weights, only bias remains.
    scale = gamma / jnp.sqrt(run_var + eps)                      # (Cout,)
    bias = (beta - run_mean * scale).reshape(1, -1).astype(jnp.float32)
    w_scaled = conv_w * scale[:, None, None, None]               # (Cout,Cin,3,3)
    # (Cout,Cin,kh,kw) -> (kw,kh,Cin,Cout) -> (9*Cin, Cout); matches the
    # kernel's patch ordering (kw outer, kh inner, cin fastest).
    w_taps = jnp.transpose(w_scaled, (3, 2, 1, 0)).reshape(9 * Cin, Cout)
    w_taps = w_taps.astype(jnp.bfloat16)

    x_nhwc = focus_space_to_depth_nhwc(x_nchw).astype(jnp.bfloat16)
    y_flat = conv3x3_bn_relu_pallas(x_nhwc, w_taps, bias)        # (B,Cout,Ho*Wo) bf16
    # Free metadata reshape: (B,Cout,Ho*Wo) and (B,Cout,Ho,Wo) share memory layout.
    return y_flat.reshape(B, Cout, Ho, Wo)


def _reference_forward(x_nchw, conv_w, gamma, beta, run_mean, run_var, eps=1e-3):
    """Pure-JAX (XLA, f32) reference for validation."""
    xf = focus_space_to_depth(x_nchw)
    y = lax.conv_general_dilated(
        xf, conv_w, window_strides=(1, 1), padding=((1, 1), (1, 1)),
        dimension_numbers=("NCHW", "OIHW", "NCHW"))
    scale = (gamma / jnp.sqrt(run_var + eps)).reshape(1, -1, 1, 1)
    bias = (beta - run_mean * gamma / jnp.sqrt(run_var + eps)).reshape(1, -1, 1, 1)
    return jnp.maximum(y * scale + bias, 0.0)


if __name__ == "__main__":
    key = jax.random.PRNGKey(0)
    k_x, k_p = jax.random.split(key)

    B, C, H, W = 2, 4, 16, 16
    OUT = 8
    x = jax.random.normal(k_x, (B, C, H, W), jnp.float32)

    conv_w, gamma, beta, run_mean, run_var = make_focus_params(C, OUT, k_p)

    fwd = jax.jit(focus_forward)
    y = jax.block_until_ready(fwd(x, conv_w, gamma, beta, run_mean, run_var))

    y_ref = _reference_forward(x, conv_w, gamma, beta, run_mean, run_var)
    assert y.shape == (B, OUT, H // 2, W // 2), y.shape
    assert y.dtype == jnp.bfloat16, y.dtype
    # bf16 operands + bf16 output (f32 accumulation) -> bf16-appropriate tolerance.
    assert jnp.allclose(y.astype(jnp.float32), y_ref, atol=5e-2, rtol=5e-2), \
        "mismatch vs reference"

    print("KERNEL_OK")
</pallas_src>

<mosaic_0001>
module attributes {stable_mosaic.version = 11 : i64} {
  func.func @_conv3x3_bn_relu_kernel(%arg0: i32, %arg1: i32, %arg2: memref<1x10x10x16xbf16, #tpu.memory_space<vmem>>, %arg3: memref<144x8xbf16, #tpu.memory_space<vmem>>, %arg4: memref<1x8xf32, #tpu.memory_space<vmem>>, %arg5: memref<1x8x64xbf16, #tpu.memory_space<vmem>>) attributes {dimension_semantics = [#tpu.dimension_semantics<parallel>, #tpu.dimension_semantics<parallel>], iteration_bounds = array<i64: 2, 1>, scalar_prefetch = 0 : i64, scratch_operands = 0 : i64, tpu.core_type = #tpu.core_type<tc>, window_params = [{transform_indices = @transform_0, window_bounds = array<i64: 1, 10, 10, 16>}, {pipeline_mode = #tpu.pipeline_mode<synchronous>, transform_indices = @transform_1, window_bounds = array<i64: 144, 8>}, {pipeline_mode = #tpu.pipeline_mode<synchronous>, transform_indices = @transform_2, window_bounds = array<i64: 1, 8>}, {transform_indices = @transform_3, window_bounds = array<i64: 1, 8, 64>}]} {
    %c8_i32 = arith.constant 8 : i32
    %0 = arith.muli %arg1, %c8_i32 : i32
    %1 = tpu.assume_multiple %0, 8 : i32
    %c0 = arith.constant 0 : index
    %2 = arith.index_cast %1 : i32 to index
    %c0_0 = arith.constant 0 : index
    %c0_1 = arith.constant 0 : index
    %3 = vector.load %arg2[%c0, %2, %c0_0, %c0_1] : memref<1x10x10x16xbf16, #tpu.memory_space<vmem>>, vector<1x10x10x16xbf16>
    %4 = vector.shape_cast %3 : vector<1x10x10x16xbf16> to vector<10x10x16xbf16>
    %5 = vector.extract_strided_slice %4 {offsets = [0, 0, 0], sizes = [10, 8, 16], strides = [1, 1, 1]} : vector<10x10x16xbf16> to vector<10x8x16xbf16>
    %6 = vector.extract_strided_slice %5 {offsets = [0, 0, 0], sizes = [8, 8, 16], strides = [1, 1, 1]} : vector<10x8x16xbf16> to vector<8x8x16xbf16>
    %7 = vector.shape_cast %6 : vector<8x8x16xbf16> to vector<64x16xbf16>
    %8 = vector.extract_strided_slice %5 {offsets = [1, 0, 0], sizes = [8, 8, 16], strides = [1, 1, 1]} : vector<10x8x16xbf16> to vector<8x8x16xbf16>
    %9 = vector.shape_cast %8 : vector<8x8x16xbf16> to vector<64x16xbf16>
    %10 = vector.extract_strided_slice %5 {offsets = [2, 0, 0], sizes = [8, 8, 16], strides = [1, 1, 1]} : vector<10x8x16xbf16> to vector<8x8x16xbf16>
    %11 = vector.shape_cast %10 : vector<8x8x16xbf16> to vector<64x16xbf16>
    %12 = vector.extract_strided_slice %4 {offsets = [0, 1, 0], sizes = [10, 8, 16], strides = [1, 1, 1]} : vector<10x10x16xbf16> to vector<10x8x16xbf16>
    %13 = vector.extract_strided_slice %12 {offsets = [0, 0, 0], sizes = [8, 8, 16], strides = [1, 1, 1]} : vector<10x8x16xbf16> to vector<8x8x16xbf16>
    %14 = vector.shape_cast %13 : vector<8x8x16xbf16> to vector<64x16xbf16>
    %15 = vector.extract_strided_slice %12 {offsets = [1, 0, 0], sizes = [8, 8, 16], strides = [1, 1, 1]} : vector<10x8x16xbf16> to vector<8x8x16xbf16>
    %16 = vector.shape_cast %15 : vector<8x8x16xbf16> to vector<64x16xbf16>
    %17 = vector.extract_strided_slice %12 {offsets = [2, 0, 0], sizes = [8, 8, 16], strides = [1, 1, 1]} : vector<10x8x16xbf16> to vector<8x8x16xbf16>
    %18 = vector.shape_cast %17 : vector<8x8x16xbf16> to vector<64x16xbf16>
    %19 = vector.extract_strided_slice %4 {offsets = [0, 2, 0], sizes = [10, 8, 16], strides = [1, 1, 1]} : vector<10x10x16xbf16> to vector<10x8x16xbf16>
    %20 = vector.extract_strided_slice %19 {offsets = [0, 0, 0], sizes = [8, 8, 16], strides = [1, 1, 1]} : vector<10x8x16xbf16> to vector<8x8x16xbf16>
    %21 = vector.shape_cast %20 : vector<8x8x16xbf16> to vector<64x16xbf16>
    %22 = vector.extract_strided_slice %19 {offsets = [1, 0, 0], sizes = [8, 8, 16], strides = [1, 1, 1]} : vector<10x8x16xbf16> to vector<8x8x16xbf16>
    %23 = vector.shape_cast %22 : vector<8x8x16xbf16> to vector<64x16xbf16>
    %24 = vector.extract_strided_slice %19 {offsets = [2, 0, 0], sizes = [8, 8, 16], strides = [1, 1, 1]} : vector<10x8x16xbf16> to vector<8x8x16xbf16>
    %25 = vector.shape_cast %24 : vector<8x8x16xbf16> to vector<64x16xbf16>
    %26 = tpu.concatenate %7, %9, %11, %14, %16, %18, %21, %23, %25 in 1 : vector<64x16xbf16>, vector<64x16xbf16>, vector<64x16xbf16>, vector<64x16xbf16>, vector<64x16xbf16>, vector<64x16xbf16>, vector<64x16xbf16>, vector<64x16xbf16>, vector<64x16xbf16> -> vector<64x144xbf16>
    %c0_2 = arith.constant 0 : index
    %c0_3 = arith.constant 0 : index
    %27 = vector.load %arg3[%c0_2, %c0_3] : memref<144x8xbf16, #tpu.memory_space<vmem>>, vector<144x8xbf16>
    %cst = arith.constant dense<0.000000e+00> : vector<64x8xf32>
    %28 = tpu.matmul %26, %27, %cst {dimension_numbers = #tpu.dot_dimension_numbers<[1], [0], [0], [1], [0, 0, 1, 1], [], []>} : vector<64x144xbf16>, vector<144x8xbf16>, vector<64x8xf32> -> vector<64x8xf32>
    %c0_4 = arith.constant 0 : index
    %c0_5 = arith.constant 0 : index
    %29 = vector.load %arg4[%c0_4, %c0_5] : memref<1x8xf32, #tpu.memory_space<vmem>>, vector<1x8xf32>
    %30 = vector.broadcast %29 : vector<1x8xf32> to vector<64x8xf32>
    %31 = arith.addf %28, %30 : vector<64x8xf32>
    %cst_6 = arith.constant 0.000000e+00 : f32
    %32 = vector.broadcast %cst_6 : f32 to vector<64x8xf32>
    %33 = arith.maximumf %31, %32 : vector<64x8xf32>
    %34 = tpu.transpose %33, [1, 0] : vector<64x8xf32> -> vector<8x64xf32>
    %35 = arith.truncf %34 : vector<8x64xf32> to vector<8x64xbf16>
    %c0_7 = arith.constant 0 : index
    %c0_8 = arith.constant 0 : index
    %c0_9 = arith.constant 0 : index
    %36 = vector.load %arg5[%c0_7, %c0_8, %c0_9] : memref<1x8x64xbf16, #tpu.memory_space<vmem>>, vector<1x8x64xbf16>
    %37 = vector.shape_cast %36 : vector<1x8x64xbf16> to vector<8x64xbf16>
    %38 = vector.shape_cast %35 : vector<8x64xbf16> to vector<1x8x64xbf16>
    tpu.vector_store %arg5[%c0_7, %c0_8, %c0_9], %38 {strides = array<i32>} : memref<1x8x64xbf16, #tpu.memory_space<vmem>>, vector<1x8x64xbf16>,
    return
  }
  func.func @transform_0(%arg0: i32, %arg1: i32) -> (i32, i32, i32, i32) {
    %c0_i32 = arith.constant 0 : i32
    %c0_i32_0 = arith.constant 0 : i32
    %c0_i32_1 = arith.constant 0 : i32
    %c0_i32_2 = arith.constant 0 : i32
    return %arg0, %c0_i32, %c0_i32_0, %c0_i32_1 : i32, i32, i32, i32
  }
  func.func @transform_1(%arg0: i32, %arg1: i32) -> (i32, i32) {
    %c0_i32 = arith.constant 0 : i32
    %c0_i32_0 = arith.constant 0 : i32
    %c0_i32_1 = arith.constant 0 : i32
    return %c0_i32, %c0_i32_0 : i32, i32
  }
  func.func @transform_2(%arg0: i32, %arg1: i32) -> (i32, i32) {
    %c0_i32 = arith.constant 0 : i32
    %c0_i32_0 = arith.constant 0 : i32
    %c0_i32_1 = arith.constant 0 : i32
    return %c0_i32, %c0_i32_0 : i32, i32
  }
  func.func @transform_3(%arg0: i32, %arg1: i32) -> (i32, i32, i32) {
    %c0_i32 = arith.constant 0 : i32
    %c0_i32_0 = arith.constant 0 : i32
    return %arg0, %c0_i32, %arg1 : i32, i32, i32
  }
}

</mosaic_0001>

<llo_original>
// kernel: focus_forward.1
$region0: #{focus_forward.1}
  #allocation0 [shape = 'u32[]', space=smem, size = 0x4, offset = 0x4, fixed_abs, tag = 'smem constant byte address 0x4 - core index']
  #allocation1 [shape = 'u32[144,128]{1,0:T(1,128)}', space=vmem, size = 0x12000, scoped, tag = 'internal scratch']
  %s0 = inlined_call_operand.vmem [shape: bf16[2,10,10,16], index: 0, kind: input, shape index: {}]
  %s1 = inlined_call_operand.vmem [shape: bf16[144,8], index: 1, kind: input, shape index: {}]
  %s2 = inlined_call_operand.vmem [shape: f32[1,8], index: 2, kind: input, shape index: {}]
  %s3 = inlined_call_operand.vmem [shape: bf16[2,8,64], index: 3, kind: output, shape index: {}]
  %s4 = sld [smem:[#allocation0]]
  $region45: #{focus_forward.1} parent=0
    _
  %s6 = ssub.s32 1, %s4
  %s7 = scalar_select 0, %s6, %s4
  loop: start=0, step=1, limit=4
  $region2: #{focus_forward.1} parent=0 // loop_pre_header
    _
  $region3: #{focus_forward.1} parent=0 // loop_header
    %s9 = sphi 0, %s13
    %p10 = scmp.ge.s32.totalorder %s9, 4
    %s16 = sphi 0, %s28
    %s17 = sphi 0, %s24
    %s18 = sphi 0, %s16
    %s19 = sphi 0, %s17
    %s20 = sphi 0, %s18
    %s21 = sphi 0, %s19
    %s31 = sphi 0, %s33
    %s34 = sphi 0, %s31
    %s35 = sphi 0, %s34
    %s51 = sphi 0, %s35
    %s55 = sphi 0, %s55
    %s57 = sphi 0, %s55
    %s58 = sphi 0, %s57
    %s72 = sphi 0, %s58
    %s76 = sphi 0, %s76
    %s78 = sphi 0, %s76
    %s79 = sphi 0, %s78
    %s93 = sphi 0, %s79
    %s101 = sphi 0, %s103
    %s104 = sphi 0, %s101
    %s105 = sphi 0, %s104
    %s121 = sphi 0, %s105
  $region4: #{focus_forward.1} parent=0 // loop_header_branch
    %12 = sbr.rel (%p10) target = $region8
  $region5: #{focus_forward.1} parent=0 // loop_body
    %s14 = ssub.s32 %s9, 1
    %s15 = ssub.s32 %s9, 2
    %s22 = sadd.s32 1, %s17
    %p23 = scmp.ge.s32.totalorder %s22, 1
    %s24 = scalar_select %p23, 0, %s22
    %s25 = sadd.s32 1, %s16
    %s26 = scalar_select %p23, %s25, %s16
    %p27 = scmp.ge.s32.totalorder %s26, 2
    %s28 = scalar_select %p27, 0, %s26
    %s29 = ssub.s32 %s16, %s28
    %p30 = scmp.eq.s32.totalorder %s29, 0
    %s32 = sadd.s32 %s31, 1
    %s33 = scalar_select %p30, %s31, %s32
    %p36 = pneg %p30
    %p37 = scmp.eq.s32.totalorder %s9, 1
    %p38 = por %p36, %p37
    %p39 = scmp.ne.s32.totalorder %s31, %s34
    %p40 = scmp.eq.s32.totalorder %s9, 0
    %p41 = por %p39, %p40
    %p42 = scmp.ne.s32.totalorder %s31, %s34
    %p43 = scmp.eq.s32.totalorder %s14, 1
    %p44 = por %p42, %p43
    %p45 = scmp.ne.s32.totalorder %s34, %s35
    %p46 = scmp.eq.s32.totalorder %s14, 0
    %p47 = por %p45, %p46
    %p48 = scmp.ne.s32.totalorder %s34, %s35
    %p49 = scmp.eq.s32.totalorder %s15, 1
    %p50 = por %p48, %p49
    %p52 = scmp.ne.s32.totalorder %s35, %s51
    %p53 = scmp.eq.s32.totalorder %s15, 0
    %p54 = por %p52, %p53
    %s56 = sadd.s32 %s55, 1
    %p59 = scmp.eq.s32.totalorder %s9, 1
    %p60 = scmp.ne.s32.totalorder %s55, %s57
    %p61 = scmp.eq.s32.totalorder %s9, 0
    %p62 = por %p60, %p61
    %p63 = scmp.ne.s32.totalorder %s55, %s57
    %p64 = scmp.eq.s32.totalorder %s14, 1
    %p65 = por %p63, %p64
    %p66 = scmp.ne.s32.totalorder %s57, %s58
    %p67 = scmp.eq.s32.totalorder %s14, 0
    %p68 = por %p66, %p67
    %p69 = scmp.ne.s32.totalorder %s57, %s58
    %p70 = scmp.eq.s32.totalorder %s15, 1
    %p71 = por %p69, %p70
    %p73 = scmp.ne.s32.totalorder %s58, %s72
    %p74 = scmp.eq.s32.totalorder %s15, 0
    %p75 = por %p73, %p74
    %s77 = sadd.s32 %s76, 1
    %p80 = scmp.eq.s32.totalorder %s9, 1
    %p81 = scmp.ne.s32.totalorder %s76, %s78
    %p82 = scmp.eq.s32.totalorder %s9, 0
    %p83 = por %p81, %p82
    %p84 = scmp.ne.s32.totalorder %s76, %s78
    %p85 = scmp.eq.s32.totalorder %s14, 1
    %p86 = por %p84, %p85
    %p87 = scmp.ne.s32.totalorder %s78, %s79
    %p88 = scmp.eq.s32.totalorder %s14, 0
    %p89 = por %p87, %p88
    %p90 = scmp.ne.s32.totalorder %s78, %s79
    %p91 = scmp.eq.s32.totalorder %s15, 1
    %p92 = por %p90, %p91
    %p94 = scmp.ne.s32.totalorder %s79, %s93
    %p95 = scmp.eq.s32.totalorder %s15, 0
    %p96 = por %p94, %p95
    %s97 = ssub.s32 %s16, %s28
    %s98 = ssub.s32 %s17, %s24
    %s99 = sor.u32 %s97, %s98
    %p100 = scmp.eq.s32.totalorder %s99, 0
    %s102 = sadd.s32 %s101, 1
    %s103 = scalar_select %p100, %s101, %s102
    %p106 = pneg %p100
    %p107 = scmp.eq.s32.totalorder %s9, 1
    %p108 = por %p106, %p107
    %p109 = scmp.ne.s32.totalorder %s101, %s104
    %p110 = scmp.eq.s32.totalorder %s9, 0
    %p111 = por %p109, %p110
    %p112 = scmp.ne.s32.totalorder %s101, %s104
    %p113 = scmp.eq.s32.totalorder %s14, 1
    %p114 = por %p112, %p113
    %p115 = scmp.ne.s32.totalorder %s104, %s105
    %p116 = scmp.eq.s32.totalorder %s14, 0
    %p117 = por %p115, %p116
    %p118 = scmp.ne.s32.totalorder %s104, %s105
    %p119 = scmp.eq.s32.totalorder %s15, 1
    %p120 = por %p118, %p119
    %p122 = scmp.ne.s32.totalorder %s105, %s121
    %p123 = scmp.eq.s32.totalorder %s15, 0
    %p124 = por %p122, %p123
    %p125 = scmp.le.s32.totalorder 1, %s9
    %p126 = scmp.lt.s32.totalorder %s9, 3
    %p127 = pnand %p125, %p126
    %p128 = pneg %p127
    // Predicated region
    $region9: #{focus_forward.1} parent=5 // pred_check
      _
    $region10: #{focus_forward.1} parent=5 // pred_check_branch
      %130 = sbr.rel (%p127) target = $region12
    $region11: #{focus_forward.1} parent=5 // pred_region
      %s131 = ssub.s32 %s9, 1
      // Predicated region
      $region13: #{focus_forward.1} parent=11 // pred_check
        %p132 = pneg %p68
      $region14: #{focus_forward.1} parent=11 // pred_check_branch
        %134 = sbr.rel (%p132) target = $region16
      $region15: #{focus_forward.1} parent=11 // pred_region
        _
      $region16: #{focus_forward.1} parent=11 // pred_fallthru
        _
      // Predicated region
      $region17: #{focus_forward.1} parent=11 // pred_check
        %p135 = pneg %p89
      $region18: #{focus_forward.1} parent=11 // pred_check_branch
        %137 = sbr.rel (%p135) target = $region20
      $region19: #{focus_forward.1} parent=11 // pred_region
        _
      $region20: #{focus_forward.1} parent=11 // pred_fallthru
        _
    $region12: #{focus_forward.1} parent=5 // pred_fallthru
      _
    %p138 = scmp.lt.s32.totalorder %s9, 2
    // Predicated region
    $region21: #{focus_forward.1} parent=5 // pred_check
      %p139 = pneg %p138
    $region22: #{focus_forward.1} parent=5 // pred_check_branch
      %141 = sbr.rel (%p139) target = $region24
    $region23: #{focus_forward.1} parent=5 // pred_region
      // Predicated region
      $region25: #{focus_forward.1} parent=23 // pred_check
        %p142 = pneg %p41
      $region26: #{focus_forward.1} parent=23 // pred_check_branch
        %144 = sbr.rel (%p142) target = $region28
      $region27: #{focus_forward.1} parent=23 // pred_region
        %p145 = scmp.lt.s32.totalorder %s16, 1
        %s146 = scalar_select %p145, %s16, 1
        %s147 = smul.addr %s146, 20
        %s148 = smul.addr %s147, 4
        %s149 = scalar_lea.vmem %s0, %s148
      $region28: #{focus_forward.1} parent=23 // pred_fallthru
        _
    $region24: #{focus_forward.1} parent=5 // pred_fallthru
      _
    %p150 = scmp.le.s32.totalorder 1, %s9
    %p151 = scmp.lt.s32.totalorder %s9, 3
    %p152 = pnand %p150, %p151
    %p153 = pneg %p152
    // Predicated region
    $region29: #{focus_forward.1} parent=5 // pred_check
      _
    $region30: #{focus_forward.1} parent=5 // pred_check_branch
      %155 = sbr.rel (%p152) target = $region32
    $region31: #{focus_forward.1} parent=5 // pred_region
      %s156 = ssub.s32 %s9, 1
      %p157 = scmp.lt.s32.totalorder %s18, 1
      %s158 = scalar_select %p157, %s18, 1
      %s159 = smul.addr %s158, 20
      %s160 = smul.addr %s159, 4
      %s161 = scalar_lea.vmem %s0, %s160
      %p162 = pneg %p47
      %p163 = pneg %p44
      %p164 = pneg %p68
      %p165 = pneg %p65
      %p166 = pneg %p89
      %p167 = pneg %p86
      %p168 = pneg %p117
      %p169 = pneg %p114
      %p170 = scmp.lt.s32.totalorder %s18, 1
      %s171 = scalar_select %p170, %s18, 1
      %p172 = scmp.lt.s32.totalorder %s19, 0
      %s173 = scalar_select %p172, %s19, 0
      %s174 = sadd.s32 %s173, %s171
      %s175 = smul.addr %s174, 4
      %s176 = scalar_lea.vmem %s3, %s175
      %p177 = scmp.lt.s32.totalorder %s18, 1
      %s178 = scalar_select %p177, %s18, 1
      %s179 = smul.addr %s178, 20
      %s180 = smul.addr %s179, 4
      %s181 = scalar_lea.vmem %s0, %s180
      %p182 = scmp.lt.s32.totalorder %s18, 1
      %s183 = scalar_select %p182, %s18, 1
      %p184 = scmp.lt.s32.totalorder %s19, 0
      %s185 = scalar_select %p184, %s19, 0
      %s186 = sadd.s32 %s185, %s183
      %s187 = smul.addr %s186, 4
      %s188 = scalar_lea.vmem %s3, %s187
      %s190 = smul.u32 %s19, 8
      %s191 = smul.u32 %s190, 2
      %s192 = smul.addr %s191, 4
      %s193 = scalar_lea.vmem %s181, %s192
      %v194 = vld [vmem:[%s193] sm:$0xf]
      %v195 = vld [vmem:[%s193 + $0x4] sm:$0x1]
      %v196 = vld [vmem:[%s193 + $0x8] sm:$0xf]
      %v197 = vld [vmem:[%s193 + $0xc] sm:$0x1]
      %v198 = vld [vmem:[%s193 + $0x10] sm:$0xf]
      %v199 = vld [vmem:[%s193 + $0x14] sm:$0x1]
      %v200 = vld [vmem:[%s193 + $0x18] sm:$0xf]
      %v201 = vld [vmem:[%s193 + $0x1c] sm:$0x1]
      %v202 = vld [vmem:[%s193 + $0x20] sm:$0xf]
      %v203 = vld [vmem:[%s193 + $0x24] sm:$0x1]
      %v204 = vld [vmem:[%s193 + $0x28] sm:$0xf]
      %v205 = vld [vmem:[%s193 + $0x2c] sm:$0x1]
      %v206 = vld [vmem:[%s193 + $0x30] sm:$0xf]
      %v207 = vld [vmem:[%s193 + $0x34] sm:$0x1]
      %v208 = vld [vmem:[%s193 + $0x38] sm:$0xf]
      %v209 = vld [vmem:[%s193 + $0x3c] sm:$0x1]
      %v210 = vld [vmem:[%s193 + $0x40] sm:$0xf]
      %v211 = vld [vmem:[%s193 + $0x44] sm:$0x1]
      %v212 = vld [vmem:[%s193 + $0x48] sm:$0xf]
      %v213 = vld [vmem:[%s193 + $0x4c] sm:$0x1]
      %vm214 = vsmask.f32 3328
      %vm215 = vsmask.f32 7440
      %vm216 = vmor %vm214, %vm215
      %v218 = vshrl.u32 %v194, 16
      %v220 = vrot.slane %v218, 4
      %v221 = vshll.u32 %v194, 16
      %v223 = vrot.slane %v221, 5
      %v224 = vor.u32 %v220, %v223
      %v225 = vrot.slane %v224, 4
      %v227 = vshll.u32 %v195, 16
      %v229 = vrot.slane %v227, 5
      %v230 = vsel %vm216, %v225, %v229
      %v232 = vshrl.u32 %v196, 16
      %v234 = vrot.slane %v232, 4
      %v235 = vshll.u32 %v196, 16
      %v237 = vrot.slane %v235, 5
      %v238 = vor.u32 %v234, %v237
      %v239 = vrot.slane %v238, 4
      %v241 = vshll.u32 %v197, 16
      %v243 = vrot.slane %v241, 5
      %v244 = vsel %vm216, %v239, %v243
      %v246 = vshrl.u32 %v198, 16
      %v248 = vrot.slane %v246, 4
      %v249 = vshll.u32 %v198, 16
      %v251 = vrot.slane %v249, 5
      %v252 = vor.u32 %v248, %v251
      %v253 = vrot.slane %v252, 4
      %v255 = vshll.u32 %v199, 16
      %v257 = vrot.slane %v255, 5
      %v258 = vsel %vm216, %v253, %v257
      %v260 = vshrl.u32 %v200, 16
      %v262 = vrot.slane %v260, 4
      %v263 = vshll.u32 %v200, 16
      %v265 = vrot.slane %v263, 5
      %v266 = vor.u32 %v262, %v265
      %v267 = vrot.slane %v266, 4
      %v269 = vshll.u32 %v201, 16
      %v271 = vrot.slane %v269, 5
      %v272 = vsel %vm216, %v267, %v271
      %v274 = vshrl.u32 %v202, 16
      %v276 = vrot.slane %v274, 4
      %v277 = vshll.u32 %v202, 16
      %v279 = vrot.slane %v277, 5
      %v280 = vor.u32 %v276, %v279
      %v281 = vrot.slane %v280, 4
      %v283 = vshll.u32 %v203, 16
      %v285 = vrot.slane %v283, 5
      %v286 = vsel %vm216, %v281, %v285
      %v288 = vshrl.u32 %v204, 16
      %v290 = vrot.slane %v288, 4
      %v291 = vshll.u32 %v204, 16
      %v293 = vrot.slane %v291, 5
      %v294 = vor.u32 %v290, %v293
      %v295 = vrot.slane %v294, 4
      %v297 = vshll.u32 %v205, 16
      %v299 = vrot.slane %v297, 5
      %v300 = vsel %vm216, %v295, %v299
      %v302 = vshrl.u32 %v206, 16
      %v304 = vrot.slane %v302, 4
      %v305 = vshll.u32 %v206, 16
      %v307 = vrot.slane %v305, 5
      %v308 = vor.u32 %v304, %v307
      %v309 = vrot.slane %v308, 4
      %v311 = vshll.u32 %v207, 16
      %v313 = vrot.slane %v311, 5
      %v314 = vsel %vm216, %v309, %v313
      %v316 = vshrl.u32 %v208, 16
      %v318 = vrot.slane %v316, 4
      %v319 = vshll.u32 %v208, 16
      %v321 = vrot.slane %v319, 5
      %v322 = vor.u32 %v318, %v321
      %v323 = vrot.slane %v322, 4
      %v325 = vshll.u32 %v209, 16
      %v327 = vrot.slane %v325, 5
      %v328 = vsel %vm216, %v323, %v327
      %v330 = vshrl.u32 %v210, 16
      %v332 = vrot.slane %v330, 4
      %v333 = vshll.u32 %v210, 16
      %v335 = vrot.slane %v333, 5
      %v336 = vor.u32 %v332, %v335
      %v337 = vrot.slane %v336, 4
      %v339 = vshll.u32 %v211, 16
      %v341 = vrot.slane %v339, 5
      %v342 = vsel %vm216, %v337, %v341
      %v344 = vshrl.u32 %v212, 16
      %v346 = vrot.slane %v344, 4
      %v347 = vshll.u32 %v212, 16
      %v349 = vrot.slane %v347, 5
      %v350 = vor.u32 %v346, %v349
      %v351 = vrot.slane %v350, 4
      %v353 = vshll.u32 %v213, 16
      %v355 = vrot.slane %v353, 5
      %v356 = vsel %vm216, %v351, %v355
      %vm373 = vcmask 1042432
      %vm374 = vcmask 1046532
      %vm375 = vmor %vm373, %vm374
      %v376 = vrot.slane %v194, 5
      %v377 = vrot.slane %v376, 4
      %v378 = vrot.slane %v195, 5
      %v379 = vsel %vm375, %v377, %v378
      %v380 = vrot.slane %v196, 5
      %v381 = vrot.slane %v380, 4
      %v382 = vrot.slane %v197, 5
      %v383 = vsel %vm375, %v381, %v382
      %v384 = vrot.slane %v198, 5
      %v385 = vrot.slane %v384, 4
      %v386 = vrot.slane %v199, 5
      %v387 = vsel %vm375, %v385, %v386
      %v388 = vrot.slane %v200, 5
      %v389 = vrot.slane %v388, 4
      %v390 = vrot.slane %v201, 5
      %v391 = vsel %vm375, %v389, %v390
      %v392 = vrot.slane %v202, 5
      %v393 = vrot.slane %v392, 4
      %v394 = vrot.slane %v203, 5
      %v395 = vsel %vm375, %v393, %v394
      %v396 = vrot.slane %v204, 5
      %v397 = vrot.slane %v396, 4
      %v398 = vrot.slane %v205, 5
      %v399 = vsel %vm375, %v397, %v398
      %v400 = vrot.slane %v206, 5
      %v401 = vrot.slane %v400, 4
      %v402 = vrot.slane %v207, 5
      %v403 = vsel %vm375, %v401, %v402
      %v404 = vrot.slane %v208, 5
      %v405 = vrot.slane %v404, 4
      %v406 = vrot.slane %v209, 5
      %v407 = vsel %vm375, %v405, %v406
      %v410 = vrot.slane %v210, 5
      %v411 = vrot.slane %v410, 4
      %v412 = vrot.slane %v211, 5
      %v413 = vsel %vm375, %v411, %v412
      %v416 = vrot.slane %v212, 5
      %v417 = vrot.slane %v416, 4
      %v418 = vrot.slane %v213, 5
      %v419 = vsel %vm375, %v417, %v418
      %v420 = vunpack.c.l.b16 %v194
      %v421 = vunpack.c.l.b16 %v196
      %v422 = vunpack.c.l.b16 %v198
      %v423 = vunpack.c.l.b16 %v200
      %v424 = vunpack.c.l.b16 %v202
      %v425 = vunpack.c.l.b16 %v204
      %v426 = vunpack.c.l.b16 %v206
      %v427 = vunpack.c.l.b16 %v208
      %v428 = vpack.c.b16 %v421, %v420
      %v429 = vpack.c.b16 %v423, %v422
      %v430 = vpack.c.b16 %v425, %v424
      %v431 = vpack.c.b16 %v427, %v426
      %v432 = vunpack.c.l.b16 %v210
      %v433 = vpack.c.b16 %v422, %v421
      %v434 = vpack.c.b16 %v424, %v423
      %v435 = vpack.c.b16 %v426, %v425
      %v436 = vpack.c.b16 %v432, %v427
      %437 = vrot.lane.b32.xlu0 %v433, 16
      %v438 = vpop.permute.xlu0 %437
      %439 = vrot.lane.b32.xlu0 %v434, 16
      %v440 = vpop.permute.xlu0 %439
      %441 = vrot.lane.b32.xlu0 %v435, 16
      %v442 = vpop.permute.xlu0 %441
      %443 = vrot.lane.b32.xlu0 %v436, 16
      %v444 = vpop.permute.xlu0 %443
      %v445 = vunpack.c.l.b16 %v212
      %v446 = vpack.c.b16 %v445, %v432
      %447 = vrot.lane.b32.xlu0 %v429, 32
      %v448 = vpop.permute.xlu0 %447
      %449 = vrot.lane.b32.xlu0 %v430, 32
      %v450 = vpop.permute.xlu0 %449
      %451 = vrot.lane.b32.xlu0 %v431, 32
      %v452 = vpop.permute.xlu0 %451
      %453 = vrot.lane.b32.xlu0 %v446, 32
      %v454 = vpop.permute.xlu0 %453
      %v455 = vunpack.c.l.b16 %v230
      %v456 = vunpack.c.l.b16 %v244
      %v457 = vunpack.c.l.b16 %v258
      %v458 = vunpack.c.l.b16 %v272
      %v459 = vunpack.c.l.b16 %v286
      %v460 = vunpack.c.l.b16 %v300
      %v461 = vunpack.c.l.b16 %v314
      %v462 = vunpack.c.l.b16 %v328
      %v463 = vpack.c.b16 %v456, %v455
      %v464 = vpack.c.b16 %v458, %v457
      %v465 = vpack.c.b16 %v460, %v459
      %v466 = vpack.c.b16 %v462, %v461
      %467 = vrot.lane.b32.xlu0 %v463, 48
      %v468 = vpop.permute.xlu0 %467
      %469 = vrot.lane.b32.xlu0 %v464, 48
      %v470 = vpop.permute.xlu0 %469
      %471 = vrot.lane.b32.xlu0 %v465, 48
      %v472 = vpop.permute.xlu0 %471
      %473 = vrot.lane.b32.xlu0 %v466, 48
      %v474 = vpop.permute.xlu0 %473
      %v475 = vunpack.c.l.b16 %v342
      %v476 = vpack.c.b16 %v457, %v456
      %v477 = vpack.c.b16 %v459, %v458
      %v478 = vpack.c.b16 %v461, %v460
      %v479 = vpack.c.b16 %v475, %v462
      %480 = vrot.lane.b32.xlu0 %v476, 64
      %v481 = vpop.permute.xlu0 %480
      %482 = vrot.lane.b32.xlu0 %v477, 64
      %v483 = vpop.permute.xlu0 %482
      %484 = vrot.lane.b32.xlu0 %v478, 64
      %v485 = vpop.permute.xlu0 %484
      %486 = vrot.lane.b32.xlu0 %v479, 64
      %v487 = vpop.permute.xlu0 %486
      %v488 = vunpack.c.l.b16 %v356
      %v489 = vpack.c.b16 %v488, %v475
      %490 = vrot.lane.b32.xlu0 %v464, 80
      %v491 = vpop.permute.xlu0 %490
      %492 = vrot.lane.b32.xlu0 %v465, 80
      %v493 = vpop.permute.xlu0 %492
      %494 = vrot.lane.b32.xlu0 %v466, 80
      %v495 = vpop.permute.xlu0 %494
      %496 = vrot.lane.b32.xlu0 %v489, 80
      %v497 = vpop.permute.xlu0 %496
      %v498 = vunpack.c.l.b16 %v379
      %v499 = vunpack.c.l.b16 %v383
      %v500 = vunpack.c.l.b16 %v387
      %v501 = vunpack.c.l.b16 %v391
      %v502 = vunpack.c.l.b16 %v395
      %v503 = vunpack.c.l.b16 %v399
      %v504 = vunpack.c.l.b16 %v403
      %v505 = vunpack.c.l.b16 %v407
      %v506 = vpack.c.b16 %v499, %v498
      %v507 = vpack.c.b16 %v501, %v500
      %v508 = vpack.c.b16 %v503, %v502
      %v509 = vpack.c.b16 %v505, %v504
      %510 = vrot.lane.b32.xlu0 %v506, 96
      %v511 = vpop.permute.xlu0 %510
      %512 = vrot.lane.b32.xlu0 %v507, 96
      %v513 = vpop.permute.xlu0 %512
      %514 = vrot.lane.b32.xlu0 %v508, 96
      %v515 = vpop.permute.xlu0 %514
      %516 = vrot.lane.b32.xlu0 %v509, 96
      %v517 = vpop.permute.xlu0 %516
      %v518 = vunpack.c.l.b16 %v413
      %v519 = vpack.c.b16 %v500, %v499
      %v520 = vpack.c.b16 %v502, %v501
      %v521 = vpack.c.b16 %v504, %v503
      %v522 = vpack.c.b16 %v518, %v505
      %523 = vrot.lane.b32.xlu0 %v519, 112
      %v524 = vpop.permute.xlu0 %523
      %525 = vrot.lane.b32.xlu0 %v520, 112
      %v526 = vpop.permute.xlu0 %525
      %527 = vrot.lane.b32.xlu0 %v521, 112
      %v528 = vpop.permute.xlu0 %527
      %529 = vrot.lane.b32.xlu0 %v522, 112
      %v530 = vpop.permute.xlu0 %529
      %v531 = vunpack.c.l.b16 %v419
      %v532 = vpack.c.b16 %v531, %v518
      %vm533 = vcmask 130048
      %v536 = vsel %vm533, %v428, %v438
      %v539 = vsel %vm533, %v429, %v440
      %v542 = vsel %vm533, %v430, %v442
      %v545 = vsel %vm533, %v431, %v444
      %vm546 = vcmask 261120
      %v548 = vsel %vm546, %v536, %v448
      %v550 = vsel %vm546, %v539, %v450
      %v552 = vsel %vm546, %v542, %v452
      %v554 = vsel %vm546, %v545, %v454
      %vm555 = vcmask 392192
      %v557 = vsel %vm555, %v548, %v468
      %v559 = vsel %vm555, %v550, %v470
      %v561 = vsel %vm555, %v552, %v472
      %v563 = vsel %vm555, %v554, %v474
      %vm564 = vcmask 523264
      %v566 = vsel %vm564, %v557, %v481
      %v568 = vsel %vm564, %v559, %v483
      %v570 = vsel %vm564, %v561, %v485
      %v572 = vsel %vm564, %v563, %v487
      %vm573 = vcmask 654336
      %v575 = vsel %vm573, %v566, %v491
      %v577 = vsel %vm573, %v568, %v493
      %v579 = vsel %vm573, %v570, %v495
      %v581 = vsel %vm573, %v572, %v497
      %vm582 = vcmask 785408
      %v584 = vsel %vm582, %v575, %v511
      %v586 = vsel %vm582, %v577, %v513
      %v588 = vsel %vm582, %v579, %v515
      %v590 = vsel %vm582, %v581, %v517
      %vm591 = vcmask 916480
      %v593 = vsel %vm591, %v584, %v524
      %v596 = vsel %vm591, %v586, %v526
      %v599 = vsel %vm591, %v588, %v528
      %v602 = vsel %vm591, %v590, %v530
      %v604 = vld [vmem:[%s1] sm:$0xf]
      %v605 = vld [vmem:[%s1 + $0x4] sm:$0xf]
      %v606 = vld [vmem:[%s1 + $0x8] sm:$0xf]
      %v607 = vld [vmem:[%s1 + $0xc] sm:$0xf]
      %v608 = vld [vmem:[%s1 + $0x10] sm:$0xf]
      %v609 = vld [vmem:[%s1 + $0x14] sm:$0xf]
      %v610 = vld [vmem:[%s1 + $0x18] sm:$0xf]
      %v611 = vld [vmem:[%s1 + $0x1c] sm:$0xf]
      %v612 = vld [vmem:[%s1 + $0x20] sm:$0xf]
      %v613 = vld [vmem:[%s1 + $0x24] sm:$0xf]
      %v614 = vld [vmem:[%s1 + $0x28] sm:$0xf]
      %v615 = vld [vmem:[%s1 + $0x2c] sm:$0xf]
      %v616 = vld [vmem:[%s1 + $0x30] sm:$0xf]
      %v617 = vld [vmem:[%s1 + $0x34] sm:$0xf]
      %v618 = vld [vmem:[%s1 + $0x38] sm:$0xf]
      %v619 = vld [vmem:[%s1 + $0x3c] sm:$0xf]
      %v620 = vld [vmem:[%s1 + $0x40] sm:$0xf]
      %v621 = vld [vmem:[%s1 + $0x44] sm:$0xf]
      %v622 = vld [vmem:[%s2] sm:$0x1]
      %v624 = vlaneseq
      %v625 = vshrl.u32 %v624, 7
      %v626 = vsub.s32 0, %v625
      %v627 = vrot.slane %v622, %v626
      %v647 = vunpack.c.l.b16 %v604
      %v648 = vunpack.c.l.b16 %v605
      %v649 = vunpack.c.l.b16 %v606
      %v650 = vunpack.c.l.b16 %v607
      %v651 = vunpack.c.l.b16 %v608
      %v652 = vunpack.c.l.b16 %v609
      %v653 = vunpack.c.l.b16 %v610
      %v654 = vunpack.c.l.b16 %v611
      %v655 = vunpack.c.l.b16 %v612
      %v656 = vunpack.c.l.b16 %v613
      %v657 = vunpack.c.l.b16 %v614
      %v658 = vunpack.c.l.b16 %v615
      %v659 = vunpack.c.l.b16 %v616
      %v660 = vunpack.c.l.b16 %v617
      %v661 = vunpack.c.l.b16 %v618
      %v662 = vunpack.c.l.b16 %v619
      %v663 = vunpack.c.l.b16 %v620
      %v664 = vunpack.c.l.b16 %v621
      %v665 = vpack.c.b16 %v648, %v647
      %v666 = vpack.c.b16 %v650, %v649
      %v667 = vpack.c.b16 %v652, %v651
      %v668 = vpack.c.b16 %v654, %v653
      %v669 = vpack.c.b16 %v656, %v655
      %v670 = vpack.c.b16 %v658, %v657
      %v671 = vpack.c.b16 %v660, %v659
      %v672 = vpack.c.b16 %v662, %v661
      %v673 = vpack.c.b16 %v664, %v663
      %v684 = vsel %vm533, %v507, 0
      %v687 = vsel %vm533, %v508, 0
      %v690 = vsel %vm533, %v509, 0
      %v693 = vsel %vm533, %v532, 0
      %695 = vmatprep.subr.bf16.mxu0 0
      %696 = vmatpush1.bf16.msra.mxu0 %v672
      %697 = vmatprep.subr.bf16.mxu0 0
      %698 = vmatpush1.bf16.msra.mxu0 %v671
      %699 = vmatprep.subr.bf16.mxu0 0
      %700 = vmatpush1.bf16.msra.mxu0 %v670
      %701 = vmatprep.subr.bf16.mxu0 0
      %702 = vmatpush1.bf16.msra.mxu0 %v669
      %703 = vmatprep.subr.bf16.mxu0 0
      %704 = vmatpush1.bf16.msra.mxu0 %v668
      %705 = vmatprep.subr.bf16.mxu0 0
      %706 = vmatpush1.bf16.msra.mxu0 %v667
      %707 = vmatprep.subr.bf16.mxu0 0
      %708 = vmatpush1.bf16.msra.mxu0 %v666
      %709 = vmatprep.subr.bf16.mxu0 0
      %710 = vmatpush1.bf16.msra.mxu0 %v665
      %711 = vmatprep.subr.bf16.mxu0 0
      %712 = vmatpush2.bf16.msra.mxu0 0
      %713 = vmatprep.subr.bf16.mxu0 0
      %714 = vmatpush2.bf16.msra.mxu0 0
      %715 = vmatprep.subr.bf16.mxu0 0
      %716 = vmatpush2.bf16.msra.mxu0 0
      %717 = vmatprep.subr.bf16.mxu0 0
      %718 = vmatpush2.bf16.msra.mxu0 0
      %719 = vmatprep.subr.bf16.mxu0 0
      %720 = vmatpush2.bf16.msra.mxu0 0
      %721 = vmatprep.subr.bf16.mxu0 0
      %722 = vmatpush2.bf16.msra.mxu0 0
      %723 = vmatprep.subr.bf16.mxu0 0
      %724 = vmatpush2.bf16.msra.mxu0 0
      %725 = vmatprep.subr.bf16.mxu0 0
      %726 = vmatpush2.bf16.msra.mxu0 %v673
      %727 = vmatprep.mubr.bf16.mxu0 %v684
      %728 = vmatmul.mubr.bf16.gmra.mxu0 %v593
      %v729 = vpop.f32.mrf.mxu0
      %v730 = vadd.f32 %v627, %v729
      %v731 = vpop.f32.mrf.mxu0
      %v732 = vpop.f32.mrf.mxu0
      %v733 = vadd.f32 %v627, %v732
      %v734 = vpop.f32.mrf.mxu0
      %735 = vmatprep.mubr.bf16.mxu0 %v687
      %736 = vmatmul.mubr.bf16.gmra.mxu0 %v596
      %v737 = vpop.f32.mrf.mxu0
      %v738 = vadd.f32 %v627, %v737
      %v739 = vpop.f32.mrf.mxu0
      %v740 = vpop.f32.mrf.mxu0
      %v741 = vadd.f32 %v627, %v740
      %v742 = vpop.f32.mrf.mxu0
      %743 = vmatprep.mubr.bf16.mxu0 %v690
      %744 = vmatmul.mubr.bf16.gmra.mxu0 %v599
      %v745 = vpop.f32.mrf.mxu0
      %v746 = vadd.f32 %v627, %v745
      %v747 = vpop.f32.mrf.mxu0
      %v748 = vpop.f32.mrf.mxu0
      %v749 = vadd.f32 %v627, %v748
      %v750 = vpop.f32.mrf.mxu0
      %751 = vmatprep.mubr.bf16.mxu0 %v693
      %752 = vmatmul.mubr.bf16.gmra.mxu0 %v602
      %v753 = vpop.f32.mrf.mxu0
      %v754 = vadd.f32 %v627, %v753
      %v755 = vpop.f32.mrf.mxu0
      %v756 = vpop.f32.mrf.mxu0
      %v757 = vadd.f32 %v627, %v756
      %v758 = vpop.f32.mrf.mxu0
      %759 = vdwg.mxu0
      %v760 = vmax.f32 %v730, 0.0
      %v761 = vmax.f32 %v733, 0.0
      %v762 = vmax.f32 %v738, 0.0
      %v763 = vmax.f32 %v741, 0.0
      %v764 = vmax.f32 %v746, 0.0
      %v765 = vmax.f32 %v749, 0.0
      %v766 = vmax.f32 %v754, 0.0
      %v767 = vmax.f32 %v757, 0.0
      %768 = vxpose.xlu0.b32.start [1/16] %v760, 128
      %769 = vxpose.xlu0.b32.cont [2/16] %v761, 128
      %770 = vxpose.xlu0.b32.cont [3/16] %v762, 128
      %771 = vxpose.xlu0.b32.cont [4/16] %v763, 128
      %772 = vxpose.xlu0.b32.cont [5/16] %v764, 128
      %773 = vxpose.xlu0.b32.cont [6/16] %v765, 128
      %774 = vxpose.xlu0.b32.cont [7/16] %v766, 128
      %775 = vxpose.xlu0.b32.cont [8/16] %v767, 128
      %776 = vxpose.xlu0.b32.cont [9/16] 0.0, 128
      %777 = vxpose.xlu0.b32.cont [10/16] 0.0, 128
      %778 = vxpose.xlu0.b32.cont [11/16] 0.0, 128
      %779 = vxpose.xlu0.b32.cont [12/16] 0.0, 128
      %780 = vxpose.xlu0.b32.cont [13/16] 0.0, 128
      %781 = vxpose.xlu0.b32.cont [14/16] 0.0, 128
      %782 = vxpose.xlu0.b32.cont [15/16] 0.0, 128
      %783 = vxpose.xlu0.b32.end [16/16] 0.0, 128
      %v784 = vpop.trf.xlu0
      %v785 = vpop.trf.xlu0
      %v786 = vpop.trf.xlu0
      %v787 = vpop.trf.xlu0
      %v788 = vpop.trf.xlu0
      %v789 = vpop.trf.xlu0
      %v790 = vpop.trf.xlu0
      %v791 = vpop.trf.xlu0
      %v792 = vpop.trf.xlu0
      %v793 = vpop.trf.xlu0
      %v794 = vpop.trf.xlu0
      %v795 = vpop.trf.xlu0
      %v796 = vpop.trf.xlu0
      %v797 = vpop.trf.xlu0
      %v798 = vpop.trf.xlu0
      %v799 = vpop.trf.xlu0
      %v800 = vpack.c.bf16 %v784, %v784
      %vm801 = vcmask 519168
      %802 = vst.msk [vmem:[%s188] sm:$0xf] %vm801, %v800
      %p803 = scmp.lt.s32.totalorder %s18, 1
      %s804 = scalar_select %p803, %s18, 1
      %p805 = scmp.lt.s32.totalorder %s19, 0
      %s806 = scalar_select %p805, %s19, 0
      %s807 = sadd.s32 %s806, %s804
      %s808 = smul.addr %s807, 4
      %s809 = scalar_lea.vmem %s3, %s808
      // Predicated region
      $region33: #{focus_forward.1} parent=31 // pred_check
        %p810 = pneg %p114
      $region34: #{focus_forward.1} parent=31 // pred_check_branch
        %812 = sbr.rel (%p810) target = $region36
      $region35: #{focus_forward.1} parent=31 // pred_region
        _
      $region36: #{focus_forward.1} parent=31 // pred_fallthru
        _
    $region32: #{focus_forward.1} parent=5 // pred_fallthru
      _
    %p813 = scmp.le.s32.totalorder 2, %s9
    // Predicated region
    $region37: #{focus_forward.1} parent=5 // pred_check
      %p814 = pneg %p813
    $region38: #{focus_forward.1} parent=5 // pred_check_branch
      %816 = sbr.rel (%p814) target = $region40
    $region39: #{focus_forward.1} parent=5 // pred_region
      %s817 = ssub.s32 %s9, 2
      // Predicated region
      $region41: #{focus_forward.1} parent=39 // pred_check
        %p818 = pneg %p120
      $region42: #{focus_forward.1} parent=39 // pred_check_branch
        %820 = sbr.rel (%p818) target = $region44
      $region43: #{focus_forward.1} parent=39 // pred_region
        %p821 = scmp.lt.s32.totalorder %s20, 1
        %s822 = scalar_select %p821, %s20, 1
        %p823 = scmp.lt.s32.totalorder %s21, 0
        %s824 = scalar_select %p823, %s21, 0
        %s825 = sadd.s32 %s824, %s822
        %s826 = smul.addr %s825, 4
        %s827 = scalar_lea.vmem %s3, %s826
      $region44: #{focus_forward.1} parent=39 // pred_fallthru
        _
    $region40: #{focus_forward.1} parent=5 // pred_fallthru
      _
  $region6: #{focus_forward.1} parent=0 // loop_footer
    %s13 = sadd.s32 1, %s9
  $region7: #{focus_forward.1} parent=0 // loop_footer_branch
    %8 = sbr.rel target = $region3
  $region8: #{focus_forward.1} parent=0 // loop_exit
    _

</llo_original>
